<compile_context>
chip_gen: v7x
topology: tpu7x:2x2x1
jax: 0.10.0
libtpu: 0.0.40
codegen_flags: <defaults>
</compile_context>

<pallas_src>
import functools

import jax
import jax.numpy as jnp
from jax import lax
from jax.experimental import pallas as pl
from jax.experimental.pallas import tpu as pltpu


def _mha_fused_kernel(xq_ref, xkv_ref, w_ref, o_ref, *, num_heads, head_size, q_tile):
    """One (batch, query-tile) step: fused QKV projection + causal attention, all heads."""
    H, hs = num_heads, head_size
    HS = H * hs

    xq = xq_ref[0]                     # (TQ, C)  query rows for this tile
    xkv = xkv_ref[0]                   # (T,  C)  full sequence (for K/V)
    w = w_ref[...]                     # (C, 3*HS) -- VMEM-resident across the grid;
                                       #              scale pre-folded into Q columns
    T = xkv.shape[0]

    # MXU operands in the input dtype (bf16 in -> bf16 operands), f32 accumulation.
    mxu_dtype = xq_ref.dtype

    # Fused projections; cast ONCE (not per head) so the f32 temps die early.
    q_all = jnp.dot(xq, w[:, :HS],
                    preferred_element_type=jnp.float32).astype(mxu_dtype)      # (TQ, HS)
    kv_all = jnp.dot(xkv, w[:, HS:],
                     preferred_element_type=jnp.float32).astype(mxu_dtype)     # (T, 2*HS)

    # Causal mask for this query tile, built once and shared by all heads.
    q_start = pl.program_id(1) * q_tile
    row = lax.broadcasted_iota(jnp.int32, (q_tile, T), 0) + q_start
    col = lax.broadcasted_iota(jnp.int32, (q_tile, T), 1)
    causal = col <= row

    # Static unroll over heads (H is a small compile-time constant); the MXU is
    # 2-D so Mosaic would unroll a batched dot_general per head anyway.
    for h in range(H):
        q = q_all[:, h * hs:(h + 1) * hs]                     # (TQ, hs)
        k = kv_all[:, h * hs:(h + 1) * hs]                    # (T, hs)
        v = kv_all[:, (H + h) * hs:(H + h + 1) * hs]          # (T, hs)

        # q @ k^T without materializing a transpose (contract the last dims).
        # Scale already folded into the Q weight columns -> no `* scale` here.
        s = lax.dot_general(q, k, (((1,), (1,)), ((), ())),
                            preferred_element_type=jnp.float32)                # (TQ, T)
        s = jnp.where(causal, s, -jnp.inf)

        # Softmax along the last dim, kept in f32; reciprocal uses the EUP slot.
        m = jnp.max(s, axis=-1, keepdims=True)
        p = jnp.exp(s - m)
        denom = jnp.sum(p, axis=-1, keepdims=True)
        attn = p * pl.reciprocal(denom, approx=True)

        out_h = jnp.dot(attn.astype(mxu_dtype), v,
                        preferred_element_type=jnp.float32)                    # (TQ, hs)

        # Direct per-head store into the head's lane slice (no concat, no live list).
        o_ref[0, :, h * hs:(h + 1) * hs] = out_h.astype(o_ref.dtype)


def build_fused_qkv_weights(wq, wk, wv):
    """Fuse per-head projection weights into one (C, 3*H*hs) slab, ONCE.

    wq/wk/wv: (H, C, hs) (transposed nn.Linear weights).
    Columns [0:HS) = Q heads (pre-scaled by C**-0.5), [HS:2HS) = K, [2HS:3HS) = V,
    head h occupying columns [h*hs:(h+1)*hs) within each block.
    """
    H, C, hs = wq.shape
    HS = H * hs
    scale = float(C) ** -0.5   # embedding-dim scaling, faithful to the PyTorch module

    def _flatten(w):            # (H, C, hs) -> (C, H*hs)
        return jnp.transpose(w, (1, 0, 2)).reshape(C, HS)

    return jnp.concatenate([_flatten(wq) * scale, _flatten(wk), _flatten(wv)], axis=-1)


@functools.partial(jax.jit, static_argnames=("num_heads", "head_size", "q_tile"))
def multi_head_attention(x, w_qkv, *, num_heads, head_size, q_tile=None):
    """x: (B, T, C);  w_qkv: (C, 3*H*hs) from build_fused_qkv_weights.

    Returns (B, T, H*hs) == torch.cat([head_h(x) for h], dim=-1).

    For bf16 MXU operands on v6e/v7x, cast x and w_qkv to bf16 before calling
    (accumulation stays f32 inside the kernel).
    """
    B, T, C = x.shape
    H, hs = num_heads, head_size
    HS = H * hs
    assert w_qkv.shape == (C, 3 * HS)

    if q_tile is None:
        q_tile = T                       # demo shapes: one query tile per batch step
    assert T % q_tile == 0
    n_q = T // q_tile

    kernel = functools.partial(_mha_fused_kernel,
                               num_heads=H, head_size=hs, q_tile=q_tile)

    return pl.pallas_call(
        kernel,
        out_shape=jax.ShapeDtypeStruct((B, T, HS), x.dtype),
        grid_spec=pltpu.PrefetchScalarGridSpec(
            num_scalar_prefetch=0,
            grid=(B, n_q),
            in_specs=[
                # Query rows for this tile.
                pl.BlockSpec((1, q_tile, C), lambda b, qi: (b, qi, 0)),
                # Full sequence for K/V projection (constant along the q-tile axis).
                pl.BlockSpec((1, T, C), lambda b, qi: (b, 0, 0)),
                # Fused QKV weights: constant block index -> DMA'd once, VMEM-resident.
                pl.BlockSpec((C, 3 * HS), lambda b, qi: (0, 0)),
            ],
            # Lane-dense output: heads already side by side on the last axis.
            out_specs=pl.BlockSpec((1, q_tile, HS), lambda b, qi: (b, qi, 0)),
        ),
        compiler_params=pltpu.CompilerParams(
            # Both axes independent -> shard across TensorCores on v7x megacore.
            dimension_semantics=("parallel", "parallel"),
        ),
    )(x, x, w_qkv)


def _reference_mha(x, wq, wk, wv):
    """Pure-JAX reference mirroring the PyTorch module semantics."""
    B, T, C = x.shape
    H, _, hs = wq.shape
    mask = jnp.tril(jnp.ones((T, T), dtype=bool))
    outs = []
    for h in range(H):
        q = x @ wq[h]
        k = x @ wk[h]
        v = x @ wv[h]
        w = (q @ jnp.swapaxes(k, 1, 2)) * (float(C) ** -0.5)
        w = jnp.where(mask[None], w, -jnp.inf)
        w = jax.nn.softmax(w, axis=-1)
        outs.append(w @ v)
    return jnp.concatenate(outs, axis=-1)


if __name__ == "__main__":
    # Small, module-consistent shapes (T <= head_size so tril[:t,:t] is well-defined).
    EMBEDDING_DIM = 32
    NUM_HEADS = 4
    HEAD_SIZE = 8
    B, T = 2, 8

    key = jax.random.PRNGKey(0)
    kx, kq, kk, kv = jax.random.split(key, 4)

    x = jax.random.normal(kx, (B, T, EMBEDDING_DIM), dtype=jnp.float32)
    # Deterministic "Linear(EMBEDDING_DIM, head_size, bias=False)" weights, stored as (H, C, hs).
    wq = jax.random.normal(kq, (NUM_HEADS, EMBEDDING_DIM, HEAD_SIZE), dtype=jnp.float32) * 0.1
    wk = jax.random.normal(kk, (NUM_HEADS, EMBEDDING_DIM, HEAD_SIZE), dtype=jnp.float32) * 0.1
    wv = jax.random.normal(kv, (NUM_HEADS, EMBEDDING_DIM, HEAD_SIZE), dtype=jnp.float32) * 0.1

    # Fused weight slab built ONCE (scale folded into Q columns), outside the call path.
    w_qkv = jax.block_until_ready(build_fused_qkv_weights(wq, wk, wv))

    y = multi_head_attention(x, w_qkv, num_heads=NUM_HEADS, head_size=HEAD_SIZE)
    y = jax.block_until_ready(y)

    y_ref = _reference_mha(x, wq, wk, wv)
    assert y.shape == (B, T, NUM_HEADS * HEAD_SIZE)
    # Tolerance allows for the EUP approximate reciprocal in the softmax
    # normalization; real errors are O(0.1+).
    assert jnp.allclose(y, y_ref, atol=5e-3, rtol=5e-3), "mismatch vs reference"

    print("KERNEL_OK")
</pallas_src>

<mosaic_0001>
module attributes {stable_mosaic.version = 11 : i64} {
  func.func @_mha_fused_kernel(%arg0: i32, %arg1: i32, %arg2: memref<1x8x32xf32, #tpu.memory_space<vmem>>, %arg3: memref<1x8x32xf32, #tpu.memory_space<vmem>>, %arg4: memref<32x96xf32, #tpu.memory_space<vmem>>, %arg5: memref<1x8x32xf32, #tpu.memory_space<vmem>>) attributes {dimension_semantics = [#tpu.dimension_semantics<parallel>, #tpu.dimension_semantics<parallel>], iteration_bounds = array<i64: 2, 1>, scalar_prefetch = 0 : i64, scratch_operands = 0 : i64, tpu.core_type = #tpu.core_type<tc>, window_params = [{transform_indices = @transform_0, window_bounds = array<i64: 1, 8, 32>}, {transform_indices = @transform_1, window_bounds = array<i64: 1, 8, 32>}, {pipeline_mode = #tpu.pipeline_mode<synchronous>, transform_indices = @transform_2, window_bounds = array<i64: 32, 96>}, {transform_indices = @transform_3, window_bounds = array<i64: 1, 8, 32>}]} {
    %c0 = arith.constant 0 : index
    %c0_0 = arith.constant 0 : index
    %c0_1 = arith.constant 0 : index
    %0 = vector.load %arg2[%c0, %c0_0, %c0_1] : memref<1x8x32xf32, #tpu.memory_space<vmem>>, vector<1x8x32xf32>
    %1 = vector.shape_cast %0 : vector<1x8x32xf32> to vector<8x32xf32>
    %c0_2 = arith.constant 0 : index
    %c0_3 = arith.constant 0 : index
    %c0_4 = arith.constant 0 : index
    %2 = vector.load %arg3[%c0_2, %c0_3, %c0_4] : memref<1x8x32xf32, #tpu.memory_space<vmem>>, vector<1x8x32xf32>
    %3 = vector.shape_cast %2 : vector<1x8x32xf32> to vector<8x32xf32>
    %c0_5 = arith.constant 0 : index
    %c0_6 = arith.constant 0 : index
    %4 = vector.load %arg4[%c0_5, %c0_6] : memref<32x96xf32, #tpu.memory_space<vmem>>, vector<32x96xf32>
    %5 = vector.extract_strided_slice %4 {offsets = [0, 0], sizes = [32, 32], strides = [1, 1]} : vector<32x96xf32> to vector<32x32xf32>
    %cst = arith.constant dense<0.000000e+00> : vector<8x32xf32>
    %6 = tpu.matmul %1, %5, %cst {dimension_numbers = #tpu.dot_dimension_numbers<[1], [0], [0], [1], [0, 0, 1, 1], [], []>} : vector<8x32xf32>, vector<32x32xf32>, vector<8x32xf32> -> vector<8x32xf32>
    %7 = vector.extract_strided_slice %4 {offsets = [0, 32], sizes = [32, 64], strides = [1, 1]} : vector<32x96xf32> to vector<32x64xf32>
    %cst_7 = arith.constant dense<0.000000e+00> : vector<8x64xf32>
    %8 = tpu.matmul %3, %7, %cst_7 {dimension_numbers = #tpu.dot_dimension_numbers<[1], [0], [0], [1], [0, 0, 1, 1], [], []>} : vector<8x32xf32>, vector<32x64xf32>, vector<8x64xf32> -> vector<8x64xf32>
    %c8_i32 = arith.constant 8 : i32
    %9 = arith.muli %arg1, %c8_i32 : i32
    %10 = tpu.iota {dimensions = array<i32: 0>} : vector<8x8xi32>
    %11 = vector.broadcast %9 : i32 to vector<8x8xi32>
    %12 = arith.addi %10, %11 : vector<8x8xi32>
    %13 = tpu.iota {dimensions = array<i32: 1>} : vector<8x8xi32>
    %14 = arith.cmpi sle, %13, %12 : vector<8x8xi32>
    %15 = vector.extract_strided_slice %6 {offsets = [0, 0], sizes = [8, 8], strides = [1, 1]} : vector<8x32xf32> to vector<8x8xf32>
    %16 = vector.extract_strided_slice %8 {offsets = [0, 0], sizes = [8, 8], strides = [1, 1]} : vector<8x64xf32> to vector<8x8xf32>
    %17 = vector.extract_strided_slice %8 {offsets = [0, 32], sizes = [8, 8], strides = [1, 1]} : vector<8x64xf32> to vector<8x8xf32>
    %cst_8 = arith.constant dense<0.000000e+00> : vector<8x8xf32>
    %18 = tpu.matmul %15, %16, %cst_8 {dimension_numbers = #tpu.dot_dimension_numbers<[1], [1], [0], [0], [0, 0, 1, 0], [], []>} : vector<8x8xf32>, vector<8x8xf32>, vector<8x8xf32> -> vector<8x8xf32>
    %cst_9 = arith.constant 0xFF800000 : f32
    %19 = vector.broadcast %cst_9 : f32 to vector<8x8xf32>
    %20 = arith.select %14, %18, %19 : vector<8x8xi1>, vector<8x8xf32>
    %cst_10 = arith.constant dense<0xFF800000> : vector<8xf32>
    %21 = vector.multi_reduction <maximumf>, %20, %cst_10 [1] : vector<8x8xf32> to vector<8xf32>
    %22 = vector.shape_cast %21 : vector<8xf32> to vector<8x1xf32>
    %23 = vector.broadcast %22 : vector<8x1xf32> to vector<8x8xf32>
    %24 = arith.subf %20, %23 : vector<8x8xf32>
    %25 = math.exp %24 : vector<8x8xf32>
    %cst_11 = arith.constant dense<0.000000e+00> : vector<8xf32>
    %26 = vector.multi_reduction <add>, %25, %cst_11 [1] : vector<8x8xf32> to vector<8xf32>
    %27 = vector.shape_cast %26 : vector<8xf32> to vector<8x1xf32>
    %28 = tpu.reciprocal %27 {approx = true} : vector<8x1xf32> -> vector<8x1xf32>
    %29 = vector.broadcast %28 : vector<8x1xf32> to vector<8x8xf32>
    %30 = arith.mulf %25, %29 : vector<8x8xf32>
    %cst_12 = arith.constant dense<0.000000e+00> : vector<8x8xf32>
    %31 = tpu.matmul %30, %17, %cst_12 {dimension_numbers = #tpu.dot_dimension_numbers<[1], [0], [0], [1], [0, 0, 1, 1], [], []>} : vector<8x8xf32>, vector<8x8xf32>, vector<8x8xf32> -> vector<8x8xf32>
    %c0_13 = arith.constant 0 : index
    %c0_14 = arith.constant 0 : index
    %c0_15 = arith.constant 0 : index
    %32 = vector.load %arg5[%c0_13, %c0_14, %c0_15] : memref<1x8x32xf32, #tpu.memory_space<vmem>>, vector<1x8x8xf32>
    %33 = vector.shape_cast %32 : vector<1x8x8xf32> to vector<8x8xf32>
    %34 = vector.shape_cast %31 : vector<8x8xf32> to vector<1x8x8xf32>
    tpu.vector_store %arg5[%c0_13, %c0_14, %c0_15], %34 {strides = array<i32>} : memref<1x8x32xf32, #tpu.memory_space<vmem>>, vector<1x8x8xf32>,
    %35 = vector.extract_strided_slice %6 {offsets = [0, 8], sizes = [8, 8], strides = [1, 1]} : vector<8x32xf32> to vector<8x8xf32>
    %36 = vector.extract_strided_slice %8 {offsets = [0, 8], sizes = [8, 8], strides = [1, 1]} : vector<8x64xf32> to vector<8x8xf32>
    %37 = vector.extract_strided_slice %8 {offsets = [0, 40], sizes = [8, 8], strides = [1, 1]} : vector<8x64xf32> to vector<8x8xf32>
    %cst_16 = arith.constant dense<0.000000e+00> : vector<8x8xf32>
    %38 = tpu.matmul %35, %36, %cst_16 {dimension_numbers = #tpu.dot_dimension_numbers<[1], [1], [0], [0], [0, 0, 1, 0], [], []>} : vector<8x8xf32>, vector<8x8xf32>, vector<8x8xf32> -> vector<8x8xf32>
    %cst_17 = arith.constant 0xFF800000 : f32
    %39 = vector.broadcast %cst_17 : f32 to vector<8x8xf32>
    %40 = arith.select %14, %38, %39 : vector<8x8xi1>, vector<8x8xf32>
    %cst_18 = arith.constant dense<0xFF800000> : vector<8xf32>
    %41 = vector.multi_reduction <maximumf>, %40, %cst_18 [1] : vector<8x8xf32> to vector<8xf32>
    %42 = vector.shape_cast %41 : vector<8xf32> to vector<8x1xf32>
    %43 = vector.broadcast %42 : vector<8x1xf32> to vector<8x8xf32>
    %44 = arith.subf %40, %43 : vector<8x8xf32>
    %45 = math.exp %44 : vector<8x8xf32>
    %cst_19 = arith.constant dense<0.000000e+00> : vector<8xf32>
    %46 = vector.multi_reduction <add>, %45, %cst_19 [1] : vector<8x8xf32> to vector<8xf32>
    %47 = vector.shape_cast %46 : vector<8xf32> to vector<8x1xf32>
    %48 = tpu.reciprocal %47 {approx = true} : vector<8x1xf32> -> vector<8x1xf32>
    %49 = vector.broadcast %48 : vector<8x1xf32> to vector<8x8xf32>
    %50 = arith.mulf %45, %49 : vector<8x8xf32>
    %cst_20 = arith.constant dense<0.000000e+00> : vector<8x8xf32>
    %51 = tpu.matmul %50, %37, %cst_20 {dimension_numbers = #tpu.dot_dimension_numbers<[1], [0], [0], [1], [0, 0, 1, 1], [], []>} : vector<8x8xf32>, vector<8x8xf32>, vector<8x8xf32> -> vector<8x8xf32>
    %c0_21 = arith.constant 0 : index
    %c0_22 = arith.constant 0 : index
    %c8 = arith.constant 8 : index
    %52 = vector.load %arg5[%c0_21, %c0_22, %c8] : memref<1x8x32xf32, #tpu.memory_space<vmem>>, vector<1x8x8xf32>
    %53 = vector.shape_cast %52 : vector<1x8x8xf32> to vector<8x8xf32>
    %54 = vector.shape_cast %51 : vector<8x8xf32> to vector<1x8x8xf32>
    tpu.vector_store %arg5[%c0_21, %c0_22, %c8], %54 {strides = array<i32>} : memref<1x8x32xf32, #tpu.memory_space<vmem>>, vector<1x8x8xf32>,
    %55 = vector.extract_strided_slice %6 {offsets = [0, 16], sizes = [8, 8], strides = [1, 1]} : vector<8x32xf32> to vector<8x8xf32>
    %56 = vector.extract_strided_slice %8 {offsets = [0, 16], sizes = [8, 8], strides = [1, 1]} : vector<8x64xf32> to vector<8x8xf32>
    %57 = vector.extract_strided_slice %8 {offsets = [0, 48], sizes = [8, 8], strides = [1, 1]} : vector<8x64xf32> to vector<8x8xf32>
    %cst_23 = arith.constant dense<0.000000e+00> : vector<8x8xf32>
    %58 = tpu.matmul %55, %56, %cst_23 {dimension_numbers = #tpu.dot_dimension_numbers<[1], [1], [0], [0], [0, 0, 1, 0], [], []>} : vector<8x8xf32>, vector<8x8xf32>, vector<8x8xf32> -> vector<8x8xf32>
    %cst_24 = arith.constant 0xFF800000 : f32
    %59 = vector.broadcast %cst_24 : f32 to vector<8x8xf32>
    %60 = arith.select %14, %58, %59 : vector<8x8xi1>, vector<8x8xf32>
    %cst_25 = arith.constant dense<0xFF800000> : vector<8xf32>
    %61 = vector.multi_reduction <maximumf>, %60, %cst_25 [1] : vector<8x8xf32> to vector<8xf32>
    %62 = vector.shape_cast %61 : vector<8xf32> to vector<8x1xf32>
    %63 = vector.broadcast %62 : vector<8x1xf32> to vector<8x8xf32>
    %64 = arith.subf %60, %63 : vector<8x8xf32>
    %65 = math.exp %64 : vector<8x8xf32>
    %cst_26 = arith.constant dense<0.000000e+00> : vector<8xf32>
    %66 = vector.multi_reduction <add>, %65, %cst_26 [1] : vector<8x8xf32> to vector<8xf32>
    %67 = vector.shape_cast %66 : vector<8xf32> to vector<8x1xf32>
    %68 = tpu.reciprocal %67 {approx = true} : vector<8x1xf32> -> vector<8x1xf32>
    %69 = vector.broadcast %68 : vector<8x1xf32> to vector<8x8xf32>
    %70 = arith.mulf %65, %69 : vector<8x8xf32>
    %cst_27 = arith.constant dense<0.000000e+00> : vector<8x8xf32>
    %71 = tpu.matmul %70, %57, %cst_27 {dimension_numbers = #tpu.dot_dimension_numbers<[1], [0], [0], [1], [0, 0, 1, 1], [], []>} : vector<8x8xf32>, vector<8x8xf32>, vector<8x8xf32> -> vector<8x8xf32>
    %c0_28 = arith.constant 0 : index
    %c0_29 = arith.constant 0 : index
    %c16 = arith.constant 16 : index
    %72 = vector.load %arg5[%c0_28, %c0_29, %c16] : memref<1x8x32xf32, #tpu.memory_space<vmem>>, vector<1x8x8xf32>
    %73 = vector.shape_cast %72 : vector<1x8x8xf32> to vector<8x8xf32>
    %74 = vector.shape_cast %71 : vector<8x8xf32> to vector<1x8x8xf32>
    tpu.vector_store %arg5[%c0_28, %c0_29, %c16], %74 {strides = array<i32>} : memref<1x8x32xf32, #tpu.memory_space<vmem>>, vector<1x8x8xf32>,
    %75 = vector.extract_strided_slice %6 {offsets = [0, 24], sizes = [8, 8], strides = [1, 1]} : vector<8x32xf32> to vector<8x8xf32>
    %76 = vector.extract_strided_slice %8 {offsets = [0, 24], sizes = [8, 8], strides = [1, 1]} : vector<8x64xf32> to vector<8x8xf32>
    %77 = vector.extract_strided_slice %8 {offsets = [0, 56], sizes = [8, 8], strides = [1, 1]} : vector<8x64xf32> to vector<8x8xf32>
    %cst_30 = arith.constant dense<0.000000e+00> : vector<8x8xf32>
    %78 = tpu.matmul %75, %76, %cst_30 {dimension_numbers = #tpu.dot_dimension_numbers<[1], [1], [0], [0], [0, 0, 1, 0], [], []>} : vector<8x8xf32>, vector<8x8xf32>, vector<8x8xf32> -> vector<8x8xf32>
    %cst_31 = arith.constant 0xFF800000 : f32
    %79 = vector.broadcast %cst_31 : f32 to vector<8x8xf32>
    %80 = arith.select %14, %78, %79 : vector<8x8xi1>, vector<8x8xf32>
    %cst_32 = arith.constant dense<0xFF800000> : vector<8xf32>
    %81 = vector.multi_reduction <maximumf>, %80, %cst_32 [1] : vector<8x8xf32> to vector<8xf32>
    %82 = vector.shape_cast %81 : vector<8xf32> to vector<8x1xf32>
    %83 = vector.broadcast %82 : vector<8x1xf32> to vector<8x8xf32>
    %84 = arith.subf %80, %83 : vector<8x8xf32>
    %85 = math.exp %84 : vector<8x8xf32>
    %cst_33 = arith.constant dense<0.000000e+00> : vector<8xf32>
    %86 = vector.multi_reduction <add>, %85, %cst_33 [1] : vector<8x8xf32> to vector<8xf32>
    %87 = vector.shape_cast %86 : vector<8xf32> to vector<8x1xf32>
    %88 = tpu.reciprocal %87 {approx = true} : vector<8x1xf32> -> vector<8x1xf32>
    %89 = vector.broadcast %88 : vector<8x1xf32> to vector<8x8xf32>
    %90 = arith.mulf %85, %89 : vector<8x8xf32>
    %cst_34 = arith.constant dense<0.000000e+00> : vector<8x8xf32>
    %91 = tpu.matmul %90, %77, %cst_34 {dimension_numbers = #tpu.dot_dimension_numbers<[1], [0], [0], [1], [0, 0, 1, 1], [], []>} : vector<8x8xf32>, vector<8x8xf32>, vector<8x8xf32> -> vector<8x8xf32>
    %c0_35 = arith.constant 0 : index
    %c0_36 = arith.constant 0 : index
    %c24 = arith.constant 24 : index
    %92 = vector.load %arg5[%c0_35, %c0_36, %c24] : memref<1x8x32xf32, #tpu.memory_space<vmem>>, vector<1x8x8xf32>
    %93 = vector.shape_cast %92 : vector<1x8x8xf32> to vector<8x8xf32>
    %94 = vector.shape_cast %91 : vector<8x8xf32> to vector<1x8x8xf32>
    tpu.vector_store %arg5[%c0_35, %c0_36, %c24], %94 {strides = array<i32>} : memref<1x8x32xf32, #tpu.memory_space<vmem>>, vector<1x8x8xf32>,
    return
  }
  func.func @transform_0(%arg0: i32, %arg1: i32) -> (i32, i32, i32) {
    %c0_i32 = arith.constant 0 : i32
    %c0_i32_0 = arith.constant 0 : i32
    return %arg0, %arg1, %c0_i32 : i32, i32, i32
  }
  func.func @transform_1(%arg0: i32, %arg1: i32) -> (i32, i32, i32) {
    %c0_i32 = arith.constant 0 : i32
    %c0_i32_0 = arith.constant 0 : i32
    %c0_i32_1 = arith.constant 0 : i32
    return %arg0, %c0_i32, %c0_i32_0 : i32, i32, i32
  }
  func.func @transform_2(%arg0: i32, %arg1: i32) -> (i32, i32) {
    %c0_i32 = arith.constant 0 : i32
    %c0_i32_0 = arith.constant 0 : i32
    %c0_i32_1 = arith.constant 0 : i32
    return %c0_i32, %c0_i32_0 : i32, i32
  }
  func.func @transform_3(%arg0: i32, %arg1: i32) -> (i32, i32, i32) {
    %c0_i32 = arith.constant 0 : i32
    %c0_i32_0 = arith.constant 0 : i32
    return %arg0, %arg1, %c0_i32 : i32, i32, i32
  }
}

</mosaic_0001>

<llo_original>
// kernel: multi_head_attention.1
$region0: #{multi_head_attention.1}
  #allocation0 [shape = 'u32[]', space=smem, size = 0x4, offset = 0x4, fixed_abs, tag = 'smem constant byte address 0x4 - core index']
  #allocation1 [shape = 'u32[144,128]{1,0:T(1,128)}', space=vmem, size = 0x12000, scoped, tag = 'internal scratch']
  %s0 = inlined_call_operand.hbm [shape: f32[2,8,32], index: 0, kind: input, shape index: {}, may-alias: {0,1}]
  %s1 = inlined_call_operand.hbm [shape: f32[2,8,32], index: 1, kind: input, shape index: {}, may-alias: {0,1}]
  %s2 = inlined_call_operand.hbm [shape: f32[32,96], index: 2, kind: input, shape index: {}]
  %s3 = inlined_call_operand.hbm [shape: f32[2,8,32], index: 3, kind: output, shape index: {}]
  %s4 = sld [smem:[#allocation0]]
  $region57: #{multi_head_attention.1} parent=0
    _
  %s6 = ssub.s32 1, %s4
  %s7 = scalar_select 0, %s6, %s4
  $region1: #{multi_head_attention.1} parent=0
    #allocation2 [shape = 'u8[8192]{0}', space=vmem, size = 0x2000, scoped, tag = 'input window, operand 0']
    #allocation3 [shape = 's32[2]{0}', space=sflag, size = 0x8, scoped, tag = 'scoped memory for multi_head_attention.1']
    #allocation4 [shape = 's32[2]{0}', space=sflag, size = 0x8, scoped, tag = 'scoped memory for multi_head_attention.1']
    #allocation5 [shape = 'u8[8192]{0}', space=vmem, size = 0x2000, scoped, tag = 'input window, operand 1']
    #allocation6 [shape = 's32[2]{0}', space=sflag, size = 0x8, scoped, tag = 'scoped memory for multi_head_attention.1']
    #allocation7 [shape = 'u8[16384]{0}', space=vmem, size = 0x4000, scoped, tag = 'input window, operand 2, single buffered']
    #allocation8 [shape = 'u8[8192]{0}', space=vmem, size = 0x2000, scoped, tag = 'output window, operand 0']
    %8 = vsyncpa [#allocation3], 0
    %s9 = scalar_lea.sflag [#allocation3], 1
    %10 = vsyncpa %s9, 0
    %11 = vsyncpa [#allocation6], 0
    %s12 = scalar_lea.sflag [#allocation6], 1
    %13 = vsyncpa %s12, 0
    %14 = vsyncpa [#allocation4], 0
    %s15 = scalar_lea.sflag [#allocation4], 1
    %16 = vsyncpa %s15, 0
    loop: start=0, step=1, limit=4
    $region2: #{multi_head_attention.1} parent=1 // loop_pre_header
      _
    $region3: #{multi_head_attention.1} parent=1 // loop_header
      %s18 = sphi 0, %s22
      %p19 = scmp.ge.s32.totalorder %s18, 4
      %s25 = sphi 0, %s37
      %s26 = sphi 0, %s33
      %s27 = sphi 0, %s25
      %s28 = sphi 0, %s26
      %s29 = sphi 0, %s27
      %s30 = sphi 0, %s28
      %s42 = sphi 0, %s44
      %s45 = sphi 0, %s42
      %s46 = sphi 0, %s45
      %s62 = sphi 0, %s46
      %s68 = sphi 0, %s70
      %s71 = sphi 0, %s68
      %s72 = sphi 0, %s71
      %s88 = sphi 0, %s72
      %s92 = sphi 0, %s92
      %s94 = sphi 0, %s92
      %s95 = sphi 0, %s94
      %s109 = sphi 0, %s95
      %s117 = sphi 0, %s119
      %s120 = sphi 0, %s117
      %s121 = sphi 0, %s120
      %s137 = sphi 0, %s121
    $region4: #{multi_head_attention.1} parent=1 // loop_header_branch
      %21 = sbr.rel (%p19) target = $region8
    $region5: #{multi_head_attention.1} parent=1 // loop_body
      %s23 = ssub.s32 %s18, 1
      %s24 = ssub.s32 %s18, 2
      %s31 = sadd.s32 1, %s26
      %p32 = scmp.ge.s32.totalorder %s31, 1
      %s33 = scalar_select %p32, 0, %s31
      %s34 = sadd.s32 1, %s25
      %s35 = scalar_select %p32, %s34, %s25
      %p36 = scmp.ge.s32.totalorder %s35, 2
      %s37 = scalar_select %p36, 0, %s35
      %s38 = ssub.s32 %s25, %s37
      %s39 = ssub.s32 %s26, %s33
      %s40 = sor.u32 %s38, %s39
      %p41 = scmp.eq.s32.totalorder %s40, 0
      %s43 = sadd.s32 %s42, 1
      %s44 = scalar_select %p41, %s42, %s43
      %p47 = pneg %p41
      %p48 = scmp.eq.s32.totalorder %s18, 1
      %p49 = por %p47, %p48
      %p50 = scmp.ne.s32.totalorder %s42, %s45
      %p51 = scmp.eq.s32.totalorder %s18, 0
      %p52 = por %p50, %p51
      %p53 = scmp.ne.s32.totalorder %s42, %s45
      %p54 = scmp.eq.s32.totalorder %s23, 1
      %p55 = por %p53, %p54
      %p56 = scmp.ne.s32.totalorder %s45, %s46
      %p57 = scmp.eq.s32.totalorder %s23, 0
      %p58 = por %p56, %p57
      %p59 = scmp.ne.s32.totalorder %s45, %s46
      %p60 = scmp.eq.s32.totalorder %s24, 1
      %p61 = por %p59, %p60
      %p63 = scmp.ne.s32.totalorder %s46, %s62
      %p64 = scmp.eq.s32.totalorder %s24, 0
      %p65 = por %p63, %p64
      %s66 = ssub.s32 %s25, %s37
      %p67 = scmp.eq.s32.totalorder %s66, 0
      %s69 = sadd.s32 %s68, 1
      %s70 = scalar_select %p67, %s68, %s69
      %p73 = pneg %p67
      %p74 = scmp.eq.s32.totalorder %s18, 1
      %p75 = por %p73, %p74
      %p76 = scmp.ne.s32.totalorder %s68, %s71
      %p77 = scmp.eq.s32.totalorder %s18, 0
      %p78 = por %p76, %p77
      %p79 = scmp.ne.s32.totalorder %s68, %s71
      %p80 = scmp.eq.s32.totalorder %s23, 1
      %p81 = por %p79, %p80
      %p82 = scmp.ne.s32.totalorder %s71, %s72
      %p83 = scmp.eq.s32.totalorder %s23, 0
      %p84 = por %p82, %p83
      %p85 = scmp.ne.s32.totalorder %s71, %s72
      %p86 = scmp.eq.s32.totalorder %s24, 1
      %p87 = por %p85, %p86
      %p89 = scmp.ne.s32.totalorder %s72, %s88
      %p90 = scmp.eq.s32.totalorder %s24, 0
      %p91 = por %p89, %p90
      %s93 = sadd.s32 %s92, 1
      %p96 = scmp.eq.s32.totalorder %s18, 1
      %p97 = scmp.ne.s32.totalorder %s92, %s94
      %p98 = scmp.eq.s32.totalorder %s18, 0
      %p99 = por %p97, %p98
      %p100 = scmp.ne.s32.totalorder %s92, %s94
      %p101 = scmp.eq.s32.totalorder %s23, 1
      %p102 = por %p100, %p101
      %p103 = scmp.ne.s32.totalorder %s94, %s95
      %p104 = scmp.eq.s32.totalorder %s23, 0
      %p105 = por %p103, %p104
      %p106 = scmp.ne.s32.totalorder %s94, %s95
      %p107 = scmp.eq.s32.totalorder %s24, 1
      %p108 = por %p106, %p107
      %p110 = scmp.ne.s32.totalorder %s95, %s109
      %p111 = scmp.eq.s32.totalorder %s24, 0
      %p112 = por %p110, %p111
      %s113 = ssub.s32 %s25, %s37
      %s114 = ssub.s32 %s26, %s33
      %s115 = sor.u32 %s113, %s114
      %p116 = scmp.eq.s32.totalorder %s115, 0
      %s118 = sadd.s32 %s117, 1
      %s119 = scalar_select %p116, %s117, %s118
      %p122 = pneg %p116
      %p123 = scmp.eq.s32.totalorder %s18, 1
      %p124 = por %p122, %p123
      %p125 = scmp.ne.s32.totalorder %s117, %s120
      %p126 = scmp.eq.s32.totalorder %s18, 0
      %p127 = por %p125, %p126
      %p128 = scmp.ne.s32.totalorder %s117, %s120
      %p129 = scmp.eq.s32.totalorder %s23, 1
      %p130 = por %p128, %p129
      %p131 = scmp.ne.s32.totalorder %s120, %s121
      %p132 = scmp.eq.s32.totalorder %s23, 0
      %p133 = por %p131, %p132
      %p134 = scmp.ne.s32.totalorder %s120, %s121
      %p135 = scmp.eq.s32.totalorder %s24, 1
      %p136 = por %p134, %p135
      %p138 = scmp.ne.s32.totalorder %s121, %s137
      %p139 = scmp.eq.s32.totalorder %s24, 0
      %p140 = por %p138, %p139
      %p141 = scmp.le.s32.totalorder 1, %s18
      %p142 = scmp.lt.s32.totalorder %s18, 3
      %p143 = pnand %p141, %p142
      %p144 = pneg %p143
      // Predicated region
      $region9: #{multi_head_attention.1} parent=5 // pred_check
        _
      $region10: #{multi_head_attention.1} parent=5 // pred_check_branch
        %146 = sbr.rel (%p143) target = $region12
      $region11: #{multi_head_attention.1} parent=5 // pred_region
        %s147 = ssub.s32 %s18, 1
        // Predicated region
        $region13: #{multi_head_attention.1} parent=11 // pred_check
          %p148 = pneg %p105
        $region14: #{multi_head_attention.1} parent=11 // pred_check_branch
          %150 = sbr.rel (%p148) target = $region16
        $region15: #{multi_head_attention.1} parent=11 // pred_region
          %s152 = ssub.s32 512, 512
          %153 = vsyncadd [#allocation6], %s152
          %s154 = sshll.u32 [#allocation7], 4
          %s155 = int_to_ptr.vmem [resolvable:$true] %s154
          %160 = dma.hbm_to_vmem [thread:$0]  %s2, 512, %s155, [#allocation6], 128, 128, 8
        $region16: #{multi_head_attention.1} parent=11 // pred_fallthru
          _
      $region12: #{multi_head_attention.1} parent=5 // pred_fallthru
        _
      %p161 = scmp.lt.s32.totalorder %s18, 2
      // Predicated region
      $region17: #{multi_head_attention.1} parent=5 // pred_check
        %p162 = pneg %p161
      $region18: #{multi_head_attention.1} parent=5 // pred_check_branch
        %164 = sbr.rel (%p162) target = $region20
      $region19: #{multi_head_attention.1} parent=5 // pred_region
        // Predicated region
        $region21: #{multi_head_attention.1} parent=19 // pred_check
          %p165 = pneg %p52
        $region22: #{multi_head_attention.1} parent=19 // pred_check_branch
          %167 = sbr.rel (%p165) target = $region24
        $region23: #{multi_head_attention.1} parent=19 // pred_region
          %s168 = sand.u32 %s42, 1
          %s169 = scalar_lea.sflag [#allocation3], %s168
          %s170 = sand.u32 %s42, 1
          %s171 = smul.addr %s170, 8
          %s172 = scalar_lea.vmem [#allocation2], %s171
          %s174 = ssub.s32 128, 128
          %175 = vsyncadd %s169, %s174
          %s176 = sadd.s32 %s26, %s25
          %s177 = smul.addr %s176, 128
          %s178 = scalar_lea.hbm %s0, %s177
          %s180 = sshll.u32 %s172, 4
          %s181 = int_to_ptr.vmem [resolvable:$true] %s180
          %183 = dma.hbm_to_vmem [thread:$0]  %s178, 128, %s181, %s169
        $region24: #{multi_head_attention.1} parent=19 // pred_fallthru
          _
        // Predicated region
        $region25: #{multi_head_attention.1} parent=19 // pred_check
          %p184 = pneg %p78
        $region26: #{multi_head_attention.1} parent=19 // pred_check_branch
          %186 = sbr.rel (%p184) target = $region28
        $region27: #{multi_head_attention.1} parent=19 // pred_region
          %s187 = sand.u32 %s18, 1
          %s188 = scalar_lea.sflag [#allocation6], %s187
          %s189 = sand.u32 %s68, 1
          %s190 = smul.addr %s189, 8
          %s191 = scalar_lea.vmem [#allocation5], %s190
          %s193 = ssub.s32 128, 128
          %194 = vsyncadd %s188, %s193
          %s195 = smul.addr %s25, 128
          %s196 = scalar_lea.hbm %s1, %s195
          %s198 = sshll.u32 %s191, 4
          %s199 = int_to_ptr.vmem [resolvable:$true] %s198
          %201 = dma.hbm_to_vmem [thread:$0]  %s196, 128, %s199, %s188
        $region28: #{multi_head_attention.1} parent=19 // pred_fallthru
          _
      $region20: #{multi_head_attention.1} parent=5 // pred_fallthru
        _
      %p202 = scmp.le.s32.totalorder 1, %s18
      %p203 = scmp.lt.s32.totalorder %s18, 3
      %p204 = pnand %p202, %p203
      %p205 = pneg %p204
      // Predicated region
      $region29: #{multi_head_attention.1} parent=5 // pred_check
        _
      $region30: #{multi_head_attention.1} parent=5 // pred_check_branch
        %207 = sbr.rel (%p204) target = $region32
      $region31: #{multi_head_attention.1} parent=5 // pred_region
        %s208 = ssub.s32 %s18, 1
        %s209 = sand.u32 %s45, 1
        %s210 = scalar_lea.sflag [#allocation3], %s209
        %s211 = sand.u32 %s45, 1
        %s212 = smul.addr %s211, 8
        %s213 = scalar_lea.vmem [#allocation2], %s212
        // Predicated region
        $region33: #{multi_head_attention.1} parent=31 // pred_check
          %p214 = pneg %p58
        $region34: #{multi_head_attention.1} parent=31 // pred_check_branch
          %216 = sbr.rel (%p214) target = $region36
        $region35: #{multi_head_attention.1} parent=31 // pred_region
          %217 = dma.done %s210, 128
        $region36: #{multi_head_attention.1} parent=31 // pred_fallthru
          _
        %s218 = sand.u32 %s23, 1
        %s219 = scalar_lea.sflag [#allocation6], %s218
        %s220 = sand.u32 %s71, 1
        %s221 = smul.addr %s220, 8
        %s222 = scalar_lea.vmem [#allocation5], %s221
        // Predicated region
        $region37: #{multi_head_attention.1} parent=31 // pred_check
          %p223 = pneg %p84
        $region38: #{multi_head_attention.1} parent=31 // pred_check_branch
          %225 = sbr.rel (%p223) target = $region40
        $region39: #{multi_head_attention.1} parent=31 // pred_region
          %226 = dma.done %s219, 128
        $region40: #{multi_head_attention.1} parent=31 // pred_fallthru
          _
        // Predicated region
        $region41: #{multi_head_attention.1} parent=31 // pred_check
          %p227 = pneg %p105
        $region42: #{multi_head_attention.1} parent=31 // pred_check_branch
          %229 = sbr.rel (%p227) target = $region44
        $region43: #{multi_head_attention.1} parent=31 // pred_region
          %230 = dma.done [#allocation6], 512
        $region44: #{multi_head_attention.1} parent=31 // pred_fallthru
          _
        %s231 = sand.u32 %s45, 1
        %s232 = scalar_lea.sflag [#allocation3], %s231
        %s233 = sand.u32 %s45, 1
        %s234 = smul.addr %s233, 8
        %s235 = scalar_lea.vmem [#allocation2], %s234
        %p236 = pneg %p58
        %p237 = pneg %p55
        %s238 = sand.u32 %s23, 1
        %s239 = scalar_lea.sflag [#allocation6], %s238
        %s240 = sand.u32 %s71, 1
        %s241 = smul.addr %s240, 8
        %s242 = scalar_lea.vmem [#allocation5], %s241
        %p243 = pneg %p84
        %p244 = pneg %p81
        %p245 = pneg %p105
        %p246 = pneg %p102
        %p247 = pneg %p133
        %p248 = pneg %p130
        %s249 = sand.u32 %s120, 1
        %s250 = scalar_lea.sflag [#allocation4], %s249
        %s251 = sand.u32 %s120, 1
        %s252 = smul.addr %s251, 8
        %s253 = scalar_lea.vmem [#allocation8], %s252
        %v254 = vld [vmem:[%s213] sm:$0xff]
        %v255 = vld [vmem:[%s222] sm:$0xff]
        %v256 = vld [vmem:[#allocation7] sm:$0xff]
        %v257 = vld [vmem:[#allocation7 + $0x8] sm:$0xff]
        %v258 = vld [vmem:[#allocation7 + $0x10] sm:$0xff]
        %v259 = vld [vmem:[#allocation7 + $0x18] sm:$0xff]
        %vm260 = vcmask 261120
        %v262 = vsel %vm260, %v254, 0
        %264 = vmatprep.subr.mxu0 0.0
        %265 = vmatpush1.msra.mxu0 %v256
        %266 = vmatprep.subr.mxu0 0.0
        %267 = vmatpush1.msra.mxu0 %v257
        %268 = vmatprep.subr.mxu0 0.0
        %269 = vmatpush1.msra.mxu0 %v258
        %270 = vmatprep.subr.mxu0 0.0
        %271 = vmatpush1.msra.mxu0 %v259
        %272 = vmatprep.subr.mxu0 0.0
        %273 = vmatpush1.msra.mxu0 0.0
        %274 = vmatprep.subr.mxu0 0.0
        %275 = vmatpush1.msra.mxu0 0.0
        %276 = vmatprep.subr.mxu0 0.0
        %277 = vmatpush1.msra.mxu0 0.0
        %278 = vmatprep.subr.mxu0 0.0
        %279 = vmatpush1.msra.mxu0 0.0
        %280 = vmatprep.subr.mxu0 0.0
        %281 = vmatpush1.msra.mxu0 0.0
        %282 = vmatprep.subr.mxu0 0.0
        %283 = vmatpush1.msra.mxu0 0.0
        %284 = vmatprep.subr.mxu0 0.0
        %285 = vmatpush1.msra.mxu0 0.0
        %286 = vmatprep.subr.mxu0 0.0
        %287 = vmatpush1.msra.mxu0 0.0
        %288 = vmatprep.subr.mxu0 0.0
        %289 = vmatpush1.msra.mxu0 0.0
        %290 = vmatprep.subr.mxu0 0.0
        %291 = vmatpush1.msra.mxu0 0.0
        %292 = vmatprep.subr.mxu0 0.0
        %293 = vmatpush1.msra.mxu0 0.0
        %294 = vmatprep.subr.mxu0 0.0
        %295 = vmatpush1.msra.mxu0 0.0
        %296 = vmatprep.subr.mxu0 0.0
        %297 = vmatpush1.msra.mxu0 0.0
        %298 = vmatprep.subr.mxu0 0.0
        %299 = vmatpush1.msra.mxu0 0.0
        %300 = vmatprep.subr.mxu0 0.0
        %301 = vmatpush1.msra.mxu0 0.0
        %302 = vmatprep.subr.mxu0 0.0
        %303 = vmatpush1.msra.mxu0 0.0
        %304 = vmatprep.subr.mxu0 0.0
        %305 = vmatpush1.msra.mxu0 0.0
        %306 = vmatprep.subr.mxu0 0.0
        %307 = vmatpush1.msra.mxu0 0.0
        %308 = vmatprep.subr.mxu0 0.0
        %309 = vmatpush1.msra.mxu0 0.0
        %310 = vmatprep.subr.mxu0 0.0
        %311 = vmatpush1.msra.mxu0 0.0
        %312 = vmatprep.subr.mxu0 0.0
        %313 = vmatpush1.msra.mxu0 0.0
        %314 = vmatprep.subr.mxu0 0.0
        %315 = vmatpush1.msra.mxu0 0.0
        %316 = vmatprep.subr.mxu0 0.0
        %317 = vmatpush1.msra.mxu0 0.0
        %318 = vmatprep.subr.mxu0 0.0
        %319 = vmatpush1.msra.mxu0 0.0
        %320 = vmatprep.subr.mxu0 0.0
        %321 = vmatpush1.msra.mxu0 0.0
        %322 = vmatprep.subr.mxu0 0.0
        %323 = vmatpush1.msra.mxu0 0.0
        %324 = vmatprep.subr.mxu0 0.0
        %325 = vmatpush1.msra.mxu0 0.0
        %326 = vmatprep.subr.mxu0 0.0
        %327 = vmatpush1.msra.mxu0 0.0
        %328 = vmatprep.mubr.f32.mxu0 0.0
        %329 = vmatmul.mubr.f32.gmra.mrb[0].mxu0 %v262
        %v330 = vpop.f32.mrb[0].mxu0
        %v331 = vadd.f32 0.0, %v330
        %v332 = vpop.f32.mrb[0].mxu0
        %333 = vdwg.mxu0
        %338 = vrot.lane.b32.xlu0 %v256, 96
        %v339 = vpop.permute.xlu0 %338
        %340 = vrot.lane.b32.xlu0 %v257, 96
        %v341 = vpop.permute.xlu0 %340
        %342 = vrot.lane.b32.xlu0 %v258, 96
        %v343 = vpop.permute.xlu0 %342
        %344 = vrot.lane.b32.xlu0 %v259, 96
        %v345 = vpop.permute.xlu0 %344
        %v351 = vsel %vm260, %v255, 0
        %353 = vmatprep.subr.mxu0 0.0
        %354 = vmatpush1.msra.mxu0 %v339
        %355 = vmatprep.subr.mxu0 0.0
        %356 = vmatpush1.msra.mxu0 %v341
        %357 = vmatprep.subr.mxu0 0.0
        %358 = vmatpush1.msra.mxu0 %v343
        %359 = vmatprep.subr.mxu0 0.0
        %360 = vmatpush1.msra.mxu0 %v345
        %361 = vmatprep.subr.mxu0 0.0
        %362 = vmatpush1.msra.mxu0 0.0
        %363 = vmatprep.subr.mxu0 0.0
        %364 = vmatpush1.msra.mxu0 0.0
        %365 = vmatprep.subr.mxu0 0.0
        %366 = vmatpush1.msra.mxu0 0.0
        %367 = vmatprep.subr.mxu0 0.0
        %368 = vmatpush1.msra.mxu0 0.0
        %369 = vmatprep.subr.mxu0 0.0
        %370 = vmatpush1.msra.mxu0 0.0
        %371 = vmatprep.subr.mxu0 0.0
        %372 = vmatpush1.msra.mxu0 0.0
        %373 = vmatprep.subr.mxu0 0.0
        %374 = vmatpush1.msra.mxu0 0.0
        %375 = vmatprep.subr.mxu0 0.0
        %376 = vmatpush1.msra.mxu0 0.0
        %377 = vmatprep.subr.mxu0 0.0
        %378 = vmatpush1.msra.mxu0 0.0
        %379 = vmatprep.subr.mxu0 0.0
        %380 = vmatpush1.msra.mxu0 0.0
        %381 = vmatprep.subr.mxu0 0.0
        %382 = vmatpush1.msra.mxu0 0.0
        %383 = vmatprep.subr.mxu0 0.0
        %384 = vmatpush1.msra.mxu0 0.0
        %385 = vmatprep.subr.mxu0 0.0
        %386 = vmatpush1.msra.mxu0 0.0
        %387 = vmatprep.subr.mxu0 0.0
        %388 = vmatpush1.msra.mxu0 0.0
        %389 = vmatprep.subr.mxu0 0.0
        %390 = vmatpush1.msra.mxu0 0.0
        %391 = vmatprep.subr.mxu0 0.0
        %392 = vmatpush1.msra.mxu0 0.0
        %393 = vmatprep.subr.mxu0 0.0
        %394 = vmatpush1.msra.mxu0 0.0
        %395 = vmatprep.subr.mxu0 0.0
        %396 = vmatpush1.msra.mxu0 0.0
        %397 = vmatprep.subr.mxu0 0.0
        %398 = vmatpush1.msra.mxu0 0.0
        %399 = vmatprep.subr.mxu0 0.0
        %400 = vmatpush1.msra.mxu0 0.0
        %401 = vmatprep.subr.mxu0 0.0
        %402 = vmatpush1.msra.mxu0 0.0
        %403 = vmatprep.subr.mxu0 0.0
        %404 = vmatpush1.msra.mxu0 0.0
        %405 = vmatprep.subr.mxu0 0.0
        %406 = vmatpush1.msra.mxu0 0.0
        %407 = vmatprep.subr.mxu0 0.0
        %408 = vmatpush1.msra.mxu0 0.0
        %409 = vmatprep.subr.mxu0 0.0
        %410 = vmatpush1.msra.mxu0 0.0
        %411 = vmatprep.subr.mxu0 0.0
        %412 = vmatpush1.msra.mxu0 0.0
        %413 = vmatprep.subr.mxu0 0.0
        %414 = vmatpush1.msra.mxu0 0.0
        %415 = vmatprep.subr.mxu0 0.0
        %416 = vmatpush1.msra.mxu0 0.0
        %417 = vmatprep.mubr.f32.mxu0 0.0
        %418 = vmatmul.mubr.f32.gmra.mrb[0].mxu0 %v351
        %v419 = vpop.f32.mrb[0].mxu0
        %v420 = vadd.f32 0.0, %v419
        %v421 = vpop.f32.mrb[0].mxu0
        %422 = vdwg.mxu0
        %s423 = smul.u32 %s28, 8
        %v424 = vlaneseq
        %v425 = vshrl.u32 %v424, 7
        %v426 = vstv %s423
        %v427 = vadd.s32 %v425, %v426
        %v428 = vlaneseq
        %v429 = vand.u32 %v428, 127
        %vm430 = vcmp.le.s32.totalorder %v429, %v427
        %vm431 = vcmask 64512
        %v433 = vsel %vm431, %v331, 0
        %v436 = vsel %vm431, %v420, 0
        %438 = vmatprep.subr.mxu0 0.0
        %439 = vmatpush1.xpose.msra.mxu0 %v436
        %440 = vmatprep.subr.mxu0 0.0
        %441 = vmatpush1.xpose.msra.mxu0 0.0
        %442 = vmatprep.subr.mxu0 0.0
        %443 = vmatpush1.xpose.msra.mxu0 0.0
        %444 = vmatprep.subr.mxu0 0.0
        %445 = vmatpush1.xpose.msra.mxu0 0.0
        %446 = vmatprep.subr.mxu0 0.0
        %447 = vmatpush1.xpose.msra.mxu0 0.0
        %448 = vmatprep.subr.mxu0 0.0
        %449 = vmatpush1.xpose.msra.mxu0 0.0
        %450 = vmatprep.subr.mxu0 0.0
        %451 = vmatpush1.xpose.msra.mxu0 0.0
        %452 = vmatprep.subr.mxu0 0.0
        %453 = vmatpush1.xpose.msra.mxu0 0.0
        %454 = vmatprep.subr.mxu0 0.0
        %455 = vmatpush1.xpose.msra.mxu0 0.0
        %456 = vmatprep.subr.mxu0 0.0
        %457 = vmatpush1.xpose.msra.mxu0 0.0
        %458 = vmatprep.subr.mxu0 0.0
        %459 = vmatpush1.xpose.msra.mxu0 0.0
        %460 = vmatprep.subr.mxu0 0.0
        %461 = vmatpush1.xpose.msra.mxu0 0.0
        %462 = vmatprep.subr.mxu0 0.0
        %463 = vmatpush1.xpose.msra.mxu0 0.0
        %464 = vmatprep.subr.mxu0 0.0
        %465 = vmatpush1.xpose.msra.mxu0 0.0
        %466 = vmatprep.subr.mxu0 0.0
        %467 = vmatpush1.xpose.msra.mxu0 0.0
        %468 = vmatprep.subr.mxu0 0.0
        %469 = vmatpush1.xpose.msra.mxu0 0.0
        %470 = vmatprep.subr.mxu0 0.0
        %471 = vmatpush1.xpose.msra.mxu0 0.0
        %472 = vmatprep.subr.mxu0 0.0
        %473 = vmatpush1.xpose.msra.mxu0 0.0
        %474 = vmatprep.subr.mxu0 0.0
        %475 = vmatpush1.xpose.msra.mxu0 0.0
        %476 = vmatprep.subr.mxu0 0.0
        %477 = vmatpush1.xpose.msra.mxu0 0.0
        %478 = vmatprep.subr.mxu0 0.0
        %479 = vmatpush1.xpose.msra.mxu0 0.0
        %480 = vmatprep.subr.mxu0 0.0
        %481 = vmatpush1.xpose.msra.mxu0 0.0
        %482 = vmatprep.subr.mxu0 0.0
        %483 = vmatpush1.xpose.msra.mxu0 0.0
        %484 = vmatprep.subr.mxu0 0.0
        %485 = vmatpush1.xpose.msra.mxu0 0.0
        %486 = vmatprep.subr.mxu0 0.0
        %487 = vmatpush1.xpose.msra.mxu0 0.0
        %488 = vmatprep.subr.mxu0 0.0
        %489 = vmatpush1.xpose.msra.mxu0 0.0
        %490 = vmatprep.subr.mxu0 0.0
        %491 = vmatpush1.xpose.msra.mxu0 0.0
        %492 = vmatprep.subr.mxu0 0.0
        %493 = vmatpush1.xpose.msra.mxu0 0.0
        %494 = vmatprep.subr.mxu0 0.0
        %495 = vmatpush1.xpose.msra.mxu0 0.0
        %496 = vmatprep.subr.mxu0 0.0
        %497 = vmatpush1.xpose.msra.mxu0 0.0
        %498 = vmatprep.subr.mxu0 0.0
        %499 = vmatpush1.xpose.msra.mxu0 0.0
        %500 = vmatprep.subr.mxu0 0.0
        %501 = vmatpush1.xpose.msra.mxu0 0.0
        %502 = vmatprep.mubr.f32.mxu0 0.0
        %503 = vmatmul.mubr.f32.gmra.mrb[0].mxu0 %v433
        %v504 = vpop.f32.mrb[0].mxu0
        %v505 = vadd.f32 0.0, %v504
        %v506 = vpop.f32.mrb[0].mxu0
        %507 = vdwg.mxu0
        %v508 = vsel %vm430, %v505, -inf
        %v509 = vsel %vm431, %v508, -inf
        %510 = vmax.xlane.f32.xlu0 %v509
        %v511 = vpop.xlane.xlu0 %510
        %v512 = vsub.f32 %v508, %v511
        %v513 = vmul.f32 %v512, 1.442695
        %v514 = vpow.pop %v513
        %v515 = vsel %vm431, %v514, 0.0
        %516 = vadd.xlane.f32.xlu0 %v515
        %v517 = vpop.xlane.xlu0 %516
        %v518 = vrcp.pop %v517
        %v519 = vmul.f32 %v514, %v518
        %520 = vrot.lane.b32.xlu0 %v420, 96
        %v521 = vpop.permute.xlu0 %520
        %v524 = vsel %vm431, %v519, 0
        %526 = vmatprep.subr.mxu0 0.0
        %527 = vmatpush1.msra.mxu0 %v521
        %528 = vmatprep.subr.mxu0 0.0
        %529 = vmatpush1.msra.mxu0 0.0
        %530 = vmatprep.subr.mxu0 0.0
        %531 = vmatpush1.msra.mxu0 0.0
        %532 = vmatprep.subr.mxu0 0.0
        %533 = vmatpush1.msra.mxu0 0.0
        %534 = vmatprep.subr.mxu0 0.0
        %535 = vmatpush1.msra.mxu0 0.0
        %536 = vmatprep.subr.mxu0 0.0
        %537 = vmatpush1.msra.mxu0 0.0
        %538 = vmatprep.subr.mxu0 0.0
        %539 = vmatpush1.msra.mxu0 0.0
        %540 = vmatprep.subr.mxu0 0.0
        %541 = vmatpush1.msra.mxu0 0.0
        %542 = vmatprep.subr.mxu0 0.0
        %543 = vmatpush1.msra.mxu0 0.0
        %544 = vmatprep.subr.mxu0 0.0
        %545 = vmatpush1.msra.mxu0 0.0
        %546 = vmatprep.subr.mxu0 0.0
        %547 = vmatpush1.msra.mxu0 0.0
        %548 = vmatprep.subr.mxu0 0.0
        %549 = vmatpush1.msra.mxu0 0.0
        %550 = vmatprep.subr.mxu0 0.0
        %551 = vmatpush1.msra.mxu0 0.0
        %552 = vmatprep.subr.mxu0 0.0
        %553 = vmatpush1.msra.mxu0 0.0
        %554 = vmatprep.subr.mxu0 0.0
        %555 = vmatpush1.msra.mxu0 0.0
        %556 = vmatprep.subr.mxu0 0.0
        %557 = vmatpush1.msra.mxu0 0.0
        %558 = vmatprep.subr.mxu0 0.0
        %559 = vmatpush1.msra.mxu0 0.0
        %560 = vmatprep.subr.mxu0 0.0
        %561 = vmatpush1.msra.mxu0 0.0
        %562 = vmatprep.subr.mxu0 0.0
        %563 = vmatpush1.msra.mxu0 0.0
        %564 = vmatprep.subr.mxu0 0.0
        %565 = vmatpush1.msra.mxu0 0.0
        %566 = vmatprep.subr.mxu0 0.0
        %567 = vmatpush1.msra.mxu0 0.0
        %568 = vmatprep.subr.mxu0 0.0
        %569 = vmatpush1.msra.mxu0 0.0
        %570 = vmatprep.subr.mxu0 0.0
        %571 = vmatpush1.msra.mxu0 0.0
        %572 = vmatprep.subr.mxu0 0.0
        %573 = vmatpush1.msra.mxu0 0.0
        %574 = vmatprep.subr.mxu0 0.0
        %575 = vmatpush1.msra.mxu0 0.0
        %576 = vmatprep.subr.mxu0 0.0
        %577 = vmatpush1.msra.mxu0 0.0
        %578 = vmatprep.subr.mxu0 0.0
        %579 = vmatpush1.msra.mxu0 0.0
        %580 = vmatprep.subr.mxu0 0.0
        %581 = vmatpush1.msra.mxu0 0.0
        %582 = vmatprep.subr.mxu0 0.0
        %583 = vmatpush1.msra.mxu0 0.0
        %584 = vmatprep.subr.mxu0 0.0
        %585 = vmatpush1.msra.mxu0 0.0
        %586 = vmatprep.subr.mxu0 0.0
        %587 = vmatpush1.msra.mxu0 0.0
        %588 = vmatprep.subr.mxu0 0.0
        %589 = vmatpush1.msra.mxu0 0.0
        %590 = vmatprep.mubr.f32.mxu0 0.0
        %591 = vmatmul.mubr.f32.gmra.mrb[0].mxu0 %v524
        %v592 = vpop.f32.mrb[0].mxu0
        %v593 = vadd.f32 0.0, %v592
        %v594 = vpop.f32.mrb[0].mxu0
        %595 = vdwg.mxu0
        %596 = vst.msk [vmem:[%s253] sm:$0xff] %vm431, %v593
        %597 = vrot.lane.b32.xlu0 %v331, 120
        %v598 = vpop.permute.xlu0 %597
        %599 = vrot.lane.b32.xlu0 %v420, 120
        %v600 = vpop.permute.xlu0 %599
        %v601 = vsel %vm431, %v598, 0
        %v603 = vsel %vm431, %v600, 0
        %605 = vmatprep.subr.mxu0 0.0
        %606 = vmatpush1.xpose.msra.mxu0 %v603
        %607 = vmatprep.subr.mxu0 0.0
        %608 = vmatpush1.xpose.msra.mxu0 0.0
        %609 = vmatprep.subr.mxu0 0.0
        %610 = vmatpush1.xpose.msra.mxu0 0.0
        %611 = vmatprep.subr.mxu0 0.0
        %612 = vmatpush1.xpose.msra.mxu0 0.0
        %613 = vmatprep.subr.mxu0 0.0
        %614 = vmatpush1.xpose.msra.mxu0 0.0
        %615 = vmatprep.subr.mxu0 0.0
        %616 = vmatpush1.xpose.msra.mxu0 0.0
        %617 = vmatprep.subr.mxu0 0.0
        %618 = vmatpush1.xpose.msra.mxu0 0.0
        %619 = vmatprep.subr.mxu0 0.0
        %620 = vmatpush1.xpose.msra.mxu0 0.0
        %621 = vmatprep.subr.mxu0 0.0
        %622 = vmatpush1.xpose.msra.mxu0 0.0
        %623 = vmatprep.subr.mxu0 0.0
        %624 = vmatpush1.xpose.msra.mxu0 0.0
        %625 = vmatprep.subr.mxu0 0.0
        %626 = vmatpush1.xpose.msra.mxu0 0.0
        %627 = vmatprep.subr.mxu0 0.0
        %628 = vmatpush1.xpose.msra.mxu0 0.0
        %629 = vmatprep.subr.mxu0 0.0
        %630 = vmatpush1.xpose.msra.mxu0 0.0
        %631 = vmatprep.subr.mxu0 0.0
        %632 = vmatpush1.xpose.msra.mxu0 0.0
        %633 = vmatprep.subr.mxu0 0.0
        %634 = vmatpush1.xpose.msra.mxu0 0.0
        %635 = vmatprep.subr.mxu0 0.0
        %636 = vmatpush1.xpose.msra.mxu0 0.0
        %637 = vmatprep.subr.mxu0 0.0
        %638 = vmatpush1.xpose.msra.mxu0 0.0
        %639 = vmatprep.subr.mxu0 0.0
        %640 = vmatpush1.xpose.msra.mxu0 0.0
        %641 = vmatprep.subr.mxu0 0.0
        %642 = vmatpush1.xpose.msra.mxu0 0.0
        %643 = vmatprep.subr.mxu0 0.0
        %644 = vmatpush1.xpose.msra.mxu0 0.0
        %645 = vmatprep.subr.mxu0 0.0
        %646 = vmatpush1.xpose.msra.mxu0 0.0
        %647 = vmatprep.subr.mxu0 0.0
        %648 = vmatpush1.xpose.msra.mxu0 0.0
        %649 = vmatprep.subr.mxu0 0.0
        %650 = vmatpush1.xpose.msra.mxu0 0.0
        %651 = vmatprep.subr.mxu0 0.0
        %652 = vmatpush1.xpose.msra.mxu0 0.0
        %653 = vmatprep.subr.mxu0 0.0
        %654 = vmatpush1.xpose.msra.mxu0 0.0
        %655 = vmatprep.subr.mxu0 0.0
        %656 = vmatpush1.xpose.msra.mxu0 0.0
        %657 = vmatprep.subr.mxu0 0.0
        %658 = vmatpush1.xpose.msra.mxu0 0.0
        %659 = vmatprep.subr.mxu0 0.0
        %660 = vmatpush1.xpose.msra.mxu0 0.0
        %661 = vmatprep.subr.mxu0 0.0
        %662 = vmatpush1.xpose.msra.mxu0 0.0
        %663 = vmatprep.subr.mxu0 0.0
        %664 = vmatpush1.xpose.msra.mxu0 0.0
        %665 = vmatprep.subr.mxu0 0.0
        %666 = vmatpush1.xpose.msra.mxu0 0.0
        %667 = vmatprep.subr.mxu0 0.0
        %668 = vmatpush1.xpose.msra.mxu0 0.0
        %669 = vmatprep.mubr.f32.mxu0 0.0
        %670 = vmatmul.mubr.f32.gmra.mrb[0].mxu0 %v601
        %v671 = vpop.f32.mrb[0].mxu0
        %v672 = vadd.f32 0.0, %v671
        %v673 = vpop.f32.mrb[0].mxu0
        %674 = vdwg.mxu0
        %v675 = vsel %vm430, %v672, -inf
        %v676 = vsel %vm431, %v675, -inf
        %677 = vmax.xlane.f32.xlu0 %v676
        %v678 = vpop.xlane.xlu0 %677
        %v679 = vsub.f32 %v675, %v678
        %v680 = vmul.f32 %v679, 1.442695
        %v681 = vpow.pop %v680
        %v682 = vsel %vm431, %v681, 0.0
        %683 = vadd.xlane.f32.xlu0 %v682
        %v684 = vpop.xlane.xlu0 %683
        %v685 = vrcp.pop %v684
        %v686 = vmul.f32 %v681, %v685
        %687 = vrot.lane.b32.xlu0 %v420, 88
        %v688 = vpop.permute.xlu0 %687
        %v691 = vsel %vm431, %v686, 0
        %693 = vmatprep.subr.mxu0 0.0
        %694 = vmatpush1.msra.mxu0 %v688
        %695 = vmatprep.subr.mxu0 0.0
        %696 = vmatpush1.msra.mxu0 0.0
        %697 = vmatprep.subr.mxu0 0.0
        %698 = vmatpush1.msra.mxu0 0.0
        %699 = vmatprep.subr.mxu0 0.0
        %700 = vmatpush1.msra.mxu0 0.0
        %701 = vmatprep.subr.mxu0 0.0
        %702 = vmatpush1.msra.mxu0 0.0
        %703 = vmatprep.subr.mxu0 0.0
        %704 = vmatpush1.msra.mxu0 0.0
        %705 = vmatprep.subr.mxu0 0.0
        %706 = vmatpush1.msra.mxu0 0.0
        %707 = vmatprep.subr.mxu0 0.0
        %708 = vmatpush1.msra.mxu0 0.0
        %709 = vmatprep.subr.mxu0 0.0
        %710 = vmatpush1.msra.mxu0 0.0
        %711 = vmatprep.subr.mxu0 0.0
        %712 = vmatpush1.msra.mxu0 0.0
        %713 = vmatprep.subr.mxu0 0.0
        %714 = vmatpush1.msra.mxu0 0.0
        %715 = vmatprep.subr.mxu0 0.0
        %716 = vmatpush1.msra.mxu0 0.0
        %717 = vmatprep.subr.mxu0 0.0
        %718 = vmatpush1.msra.mxu0 0.0
        %719 = vmatprep.subr.mxu0 0.0
        %720 = vmatpush1.msra.mxu0 0.0
        %721 = vmatprep.subr.mxu0 0.0
        %722 = vmatpush1.msra.mxu0 0.0
        %723 = vmatprep.subr.mxu0 0.0
        %724 = vmatpush1.msra.mxu0 0.0
        %725 = vmatprep.subr.mxu0 0.0
        %726 = vmatpush1.msra.mxu0 0.0
        %727 = vmatprep.subr.mxu0 0.0
        %728 = vmatpush1.msra.mxu0 0.0
        %729 = vmatprep.subr.mxu0 0.0
        %730 = vmatpush1.msra.mxu0 0.0
        %731 = vmatprep.subr.mxu0 0.0
        %732 = vmatpush1.msra.mxu0 0.0
        %733 = vmatprep.subr.mxu0 0.0
        %734 = vmatpush1.msra.mxu0 0.0
        %735 = vmatprep.subr.mxu0 0.0
        %736 = vmatpush1.msra.mxu0 0.0
        %737 = vmatprep.subr.mxu0 0.0
        %738 = vmatpush1.msra.mxu0 0.0
        %739 = vmatprep.subr.mxu0 0.0
        %740 = vmatpush1.msra.mxu0 0.0
        %741 = vmatprep.subr.mxu0 0.0
        %742 = vmatpush1.msra.mxu0 0.0
        %743 = vmatprep.subr.mxu0 0.0
        %744 = vmatpush1.msra.mxu0 0.0
        %745 = vmatprep.subr.mxu0 0.0
        %746 = vmatpush1.msra.mxu0 0.0
        %747 = vmatprep.subr.mxu0 0.0
        %748 = vmatpush1.msra.mxu0 0.0
        %749 = vmatprep.subr.mxu0 0.0
        %750 = vmatpush1.msra.mxu0 0.0
        %751 = vmatprep.subr.mxu0 0.0
        %752 = vmatpush1.msra.mxu0 0.0
        %753 = vmatprep.subr.mxu0 0.0
        %754 = vmatpush1.msra.mxu0 0.0
        %755 = vmatprep.subr.mxu0 0.0
        %756 = vmatpush1.msra.mxu0 0.0
        %757 = vmatprep.mubr.f32.mxu0 0.0
        %758 = vmatmul.mubr.f32.gmra.mrb[0].mxu0 %v691
        %v759 = vpop.f32.mrb[0].mxu0
        %v760 = vadd.f32 0.0, %v759
        %v761 = vpop.f32.mrb[0].mxu0
        %762 = vdwg.mxu0
        %764 = vrot.lane.b32.xlu0 %v760, 8
        %v765 = vpop.permute.xlu0 %764
        %vm767 = vcmask 130112
        %768 = vst.msk [vmem:[%s253] sm:$0xff] %vm767, %v765
        %769 = vrot.lane.b32.xlu0 %v331, 112
        %v770 = vpop.permute.xlu0 %769
        %771 = vrot.lane.b32.xlu0 %v420, 112
        %v772 = vpop.permute.xlu0 %771
        %v773 = vsel %vm431, %v770, 0
        %v775 = vsel %vm431, %v772, 0
        %777 = vmatprep.subr.mxu0 0.0
        %778 = vmatpush1.xpose.msra.mxu0 %v775
        %779 = vmatprep.subr.mxu0 0.0
        %780 = vmatpush1.xpose.msra.mxu0 0.0
        %781 = vmatprep.subr.mxu0 0.0
        %782 = vmatpush1.xpose.msra.mxu0 0.0
        %783 = vmatprep.subr.mxu0 0.0
        %784 = vmatpush1.xpose.msra.mxu0 0.0
        %785 = vmatprep.subr.mxu0 0.0
        %786 = vmatpush1.xpose.msra.mxu0 0.0
        %787 = vmatprep.subr.mxu0 0.0
        %788 = vmatpush1.xpose.msra.mxu0 0.0
        %789 = vmatprep.subr.mxu0 0.0
        %790 = vmatpush1.xpose.msra.mxu0 0.0
        %791 = vmatprep.subr.mxu0 0.0
        %792 = vmatpush1.xpose.msra.mxu0 0.0
        %793 = vmatprep.subr.mxu0 0.0
        %794 = vmatpush1.xpose.msra.mxu0 0.0
        %795 = vmatprep.subr.mxu0 0.0
        %796 = vmatpush1.xpose.msra.mxu0 0.0
        %797 = vmatprep.subr.mxu0 0.0
        %798 = vmatpush1.xpose.msra.mxu0 0.0
        %799 = vmatprep.subr.mxu0 0.0
        %800 = vmatpush1.xpose.msra.mxu0 0.0
        %801 = vmatprep.subr.mxu0 0.0
        %802 = vmatpush1.xpose.msra.mxu0 0.0
        %803 = vmatprep.subr.mxu0 0.0
        %804 = vmatpush1.xpose.msra.mxu0 0.0
        %805 = vmatprep.subr.mxu0 0.0
        %806 = vmatpush1.xpose.msra.mxu0 0.0
        %807 = vmatprep.subr.mxu0 0.0
        %808 = vmatpush1.xpose.msra.mxu0 0.0
        %809 = vmatprep.subr.mxu0 0.0
        %810 = vmatpush1.xpose.msra.mxu0 0.0
        %811 = vmatprep.subr.mxu0 0.0
        %812 = vmatpush1.xpose.msra.mxu0 0.0
        %813 = vmatprep.subr.mxu0 0.0
        %814 = vmatpush1.xpose.msra.mxu0 0.0
        %815 = vmatprep.subr.mxu0 0.0
        %816 = vmatpush1.xpose.msra.mxu0 0.0
        %817 = vmatprep.subr.mxu0 0.0
        %818 = vmatpush1.xpose.msra.mxu0 0.0
        %819 = vmatprep.subr.mxu0 0.0
        %820 = vmatpush1.xpose.msra.mxu0 0.0
        %821 = vmatprep.subr.mxu0 0.0
        %822 = vmatpush1.xpose.msra.mxu0 0.0
        %823 = vmatprep.subr.mxu0 0.0
        %824 = vmatpush1.xpose.msra.mxu0 0.0
        %825 = vmatprep.subr.mxu0 0.0
        %826 = vmatpush1.xpose.msra.mxu0 0.0
        %827 = vmatprep.subr.mxu0 0.0
        %828 = vmatpush1.xpose.msra.mxu0 0.0
        %829 = vmatprep.subr.mxu0 0.0
        %830 = vmatpush1.xpose.msra.mxu0 0.0
        %831 = vmatprep.subr.mxu0 0.0
        %832 = vmatpush1.xpose.msra.mxu0 0.0
        %833 = vmatprep.subr.mxu0 0.0
        %834 = vmatpush1.xpose.msra.mxu0 0.0
        %835 = vmatprep.subr.mxu0 0.0
        %836 = vmatpush1.xpose.msra.mxu0 0.0
        %837 = vmatprep.subr.mxu0 0.0
        %838 = vmatpush1.xpose.msra.mxu0 0.0
        %839 = vmatprep.subr.mxu0 0.0
        %840 = vmatpush1.xpose.msra.mxu0 0.0
        %841 = vmatprep.mubr.f32.mxu0 0.0
        %842 = vmatmul.mubr.f32.gmra.mrb[0].mxu0 %v773
        %v843 = vpop.f32.mrb[0].mxu0
        %v844 = vadd.f32 0.0, %v843
        %v845 = vpop.f32.mrb[0].mxu0
        %846 = vdwg.mxu0
        %v847 = vsel %vm430, %v844, -inf
        %v848 = vsel %vm431, %v847, -inf
        %849 = vmax.xlane.f32.xlu0 %v848
        %v850 = vpop.xlane.xlu0 %849
        %v851 = vsub.f32 %v847, %v850
        %v852 = vmul.f32 %v851, 1.442695
        %v853 = vpow.pop %v852
        %v854 = vsel %vm431, %v853, 0.0
        %855 = vadd.xlane.f32.xlu0 %v854
        %v856 = vpop.xlane.xlu0 %855
        %v857 = vrcp.pop %v856
        %v858 = vmul.f32 %v853, %v857
        %859 = vrot.lane.b32.xlu0 %v420, 80
        %v860 = vpop.permute.xlu0 %859
        %v863 = vsel %vm431, %v858, 0
        %865 = vmatprep.subr.mxu0 0.0
        %866 = vmatpush1.msra.mxu0 %v860
        %867 = vmatprep.subr.mxu0 0.0
        %868 = vmatpush1.msra.mxu0 0.0
        %869 = vmatprep.subr.mxu0 0.0
        %870 = vmatpush1.msra.mxu0 0.0
        %871 = vmatprep.subr.mxu0 0.0
        %872 = vmatpush1.msra.mxu0 0.0
        %873 = vmatprep.subr.mxu0 0.0
        %874 = vmatpush1.msra.mxu0 0.0
        %875 = vmatprep.subr.mxu0 0.0
        %876 = vmatpush1.msra.mxu0 0.0
        %877 = vmatprep.subr.mxu0 0.0
        %878 = vmatpush1.msra.mxu0 0.0
        %879 = vmatprep.subr.mxu0 0.0
        %880 = vmatpush1.msra.mxu0 0.0
        %881 = vmatprep.subr.mxu0 0.0
        %882 = vmatpush1.msra.mxu0 0.0
        %883 = vmatprep.subr.mxu0 0.0
        %884 = vmatpush1.msra.mxu0 0.0
        %885 = vmatprep.subr.mxu0 0.0
        %886 = vmatpush1.msra.mxu0 0.0
        %887 = vmatprep.subr.mxu0 0.0
        %888 = vmatpush1.msra.mxu0 0.0
        %889 = vmatprep.subr.mxu0 0.0
        %890 = vmatpush1.msra.mxu0 0.0
        %891 = vmatprep.subr.mxu0 0.0
        %892 = vmatpush1.msra.mxu0 0.0
        %893 = vmatprep.subr.mxu0 0.0
        %894 = vmatpush1.msra.mxu0 0.0
        %895 = vmatprep.subr.mxu0 0.0
        %896 = vmatpush1.msra.mxu0 0.0
        %897 = vmatprep.subr.mxu0 0.0
        %898 = vmatpush1.msra.mxu0 0.0
        %899 = vmatprep.subr.mxu0 0.0
        %900 = vmatpush1.msra.mxu0 0.0
        %901 = vmatprep.subr.mxu0 0.0
        %902 = vmatpush1.msra.mxu0 0.0
        %903 = vmatprep.subr.mxu0 0.0
        %904 = vmatpush1.msra.mxu0 0.0
        %905 = vmatprep.subr.mxu0 0.0
        %906 = vmatpush1.msra.mxu0 0.0
        %907 = vmatprep.subr.mxu0 0.0
        %908 = vmatpush1.msra.mxu0 0.0
        %909 = vmatprep.subr.mxu0 0.0
        %910 = vmatpush1.msra.mxu0 0.0
        %911 = vmatprep.subr.mxu0 0.0
        %912 = vmatpush1.msra.mxu0 0.0
        %913 = vmatprep.subr.mxu0 0.0
        %914 = vmatpush1.msra.mxu0 0.0
        %915 = vmatprep.subr.mxu0 0.0
        %916 = vmatpush1.msra.mxu0 0.0
        %917 = vmatprep.subr.mxu0 0.0
        %918 = vmatpush1.msra.mxu0 0.0
        %919 = vmatprep.subr.mxu0 0.0
        %920 = vmatpush1.msra.mxu0 0.0
        %921 = vmatprep.subr.mxu0 0.0
        %922 = vmatpush1.msra.mxu0 0.0
        %923 = vmatprep.subr.mxu0 0.0
        %924 = vmatpush1.msra.mxu0 0.0
        %925 = vmatprep.subr.mxu0 0.0
        %926 = vmatpush1.msra.mxu0 0.0
        %927 = vmatprep.subr.mxu0 0.0
        %928 = vmatpush1.msra.mxu0 0.0
        %929 = vmatprep.mubr.f32.mxu0 0.0
        %930 = vmatmul.mubr.f32.gmra.mrb[0].mxu0 %v863
        %v931 = vpop.f32.mrb[0].mxu0
        %v932 = vadd.f32 0.0, %v931
        %v933 = vpop.f32.mrb[0].mxu0
        %934 = vdwg.mxu0
        %936 = vrot.lane.b32.xlu0 %v932, 16
        %v937 = vpop.permute.xlu0 %936
        %vm939 = vcmask 195712
        %940 = vst.msk [vmem:[%s253] sm:$0xff] %vm939, %v937
        %941 = vrot.lane.b32.xlu0 %v331, 104
        %v942 = vpop.permute.xlu0 %941
        %943 = vrot.lane.b32.xlu0 %v420, 104
        %v944 = vpop.permute.xlu0 %943
        %v945 = vsel %vm431, %v942, 0
        %v947 = vsel %vm431, %v944, 0
        %949 = vmatprep.subr.mxu0 0.0
        %950 = vmatpush1.xpose.msra.mxu0 %v947
        %951 = vmatprep.subr.mxu0 0.0
        %952 = vmatpush1.xpose.msra.mxu0 0.0
        %953 = vmatprep.subr.mxu0 0.0
        %954 = vmatpush1.xpose.msra.mxu0 0.0
        %955 = vmatprep.subr.mxu0 0.0
        %956 = vmatpush1.xpose.msra.mxu0 0.0
        %957 = vmatprep.subr.mxu0 0.0
        %958 = vmatpush1.xpose.msra.mxu0 0.0
        %959 = vmatprep.subr.mxu0 0.0
        %960 = vmatpush1.xpose.msra.mxu0 0.0
        %961 = vmatprep.subr.mxu0 0.0
        %962 = vmatpush1.xpose.msra.mxu0 0.0
        %963 = vmatprep.subr.mxu0 0.0
        %964 = vmatpush1.xpose.msra.mxu0 0.0
        %965 = vmatprep.subr.mxu0 0.0
        %966 = vmatpush1.xpose.msra.mxu0 0.0
        %967 = vmatprep.subr.mxu0 0.0
        %968 = vmatpush1.xpose.msra.mxu0 0.0
        %969 = vmatprep.subr.mxu0 0.0
        %970 = vmatpush1.xpose.msra.mxu0 0.0
        %971 = vmatprep.subr.mxu0 0.0
        %972 = vmatpush1.xpose.msra.mxu0 0.0
        %973 = vmatprep.subr.mxu0 0.0
        %974 = vmatpush1.xpose.msra.mxu0 0.0
        %975 = vmatprep.subr.mxu0 0.0
        %976 = vmatpush1.xpose.msra.mxu0 0.0
        %977 = vmatprep.subr.mxu0 0.0
        %978 = vmatpush1.xpose.msra.mxu0 0.0
        %979 = vmatprep.subr.mxu0 0.0
        %980 = vmatpush1.xpose.msra.mxu0 0.0
        %981 = vmatprep.subr.mxu0 0.0
        %982 = vmatpush1.xpose.msra.mxu0 0.0
        %983 = vmatprep.subr.mxu0 0.0
        %984 = vmatpush1.xpose.msra.mxu0 0.0
        %985 = vmatprep.subr.mxu0 0.0
        %986 = vmatpush1.xpose.msra.mxu0 0.0
        %987 = vmatprep.subr.mxu0 0.0
        %988 = vmatpush1.xpose.msra.mxu0 0.0
        %989 = vmatprep.subr.mxu0 0.0
        %990 = vmatpush1.xpose.msra.mxu0 0.0
        %991 = vmatprep.subr.mxu0 0.0
        %992 = vmatpush1.xpose.msra.mxu0 0.0
        %993 = vmatprep.subr.mxu0 0.0
        %994 = vmatpush1.xpose.msra.mxu0 0.0
        %995 = vmatprep.subr.mxu0 0.0
        %996 = vmatpush1.xpose.msra.mxu0 0.0
        %997 = vmatprep.subr.mxu0 0.0
        %998 = vmatpush1.xpose.msra.mxu0 0.0
        %999 = vmatprep.subr.mxu0 0.0
        %1000 = vmatpush1.xpose.msra.mxu0 0.0
        %1001 = vmatprep.subr.mxu0 0.0
        %1002 = vmatpush1.xpose.msra.mxu0 0.0
        %1003 = vmatprep.subr.mxu0 0.0
        %1004 = vmatpush1.xpose.msra.mxu0 0.0
        %1005 = vmatprep.subr.mxu0 0.0
        %1006 = vmatpush1.xpose.msra.mxu0 0.0
        %1007 = vmatprep.subr.mxu0 0.0
        %1008 = vmatpush1.xpose.msra.mxu0 0.0
        %1009 = vmatprep.subr.mxu0 0.0
        %1010 = vmatpush1.xpose.msra.mxu0 0.0
        %1011 = vmatprep.subr.mxu0 0.0
        %1012 = vmatpush1.xpose.msra.mxu0 0.0
        %1013 = vmatprep.mubr.f32.mxu0 0.0
        %1014 = vmatmul.mubr.f32.gmra.mrb[0].mxu0 %v945
        %v1015 = vpop.f32.mrb[0].mxu0
        %v1016 = vadd.f32 0.0, %v1015
        %v1017 = vpop.f32.mrb[0].mxu0
        %1018 = vdwg.mxu0
        %v1019 = vsel %vm430, %v1016, -inf
        %v1020 = vsel %vm431, %v1019, -inf
        %1021 = vmax.xlane.f32.xlu0 %v1020
        %v1022 = vpop.xlane.xlu0 %1021
        %v1023 = vsub.f32 %v1019, %v1022
        %v1024 = vmul.f32 %v1023, 1.442695
        %v1025 = vpow.pop %v1024
        %v1026 = vsel %vm431, %v1025, 0.0
        %1027 = vadd.xlane.f32.xlu0 %v1026
        %v1028 = vpop.xlane.xlu0 %1027
        %v1029 = vrcp.pop %v1028
        %v1030 = vmul.f32 %v1025, %v1029
        %1031 = vrot.lane.b32.xlu0 %v420, 72
        %v1032 = vpop.permute.xlu0 %1031
        %v1035 = vsel %vm431, %v1030, 0
        %1037 = vmatprep.subr.mxu0 0.0
        %1038 = vmatpush1.msra.mxu0 %v1032
        %1039 = vmatprep.subr.mxu0 0.0
        %1040 = vmatpush1.msra.mxu0 0.0
        %1041 = vmatprep.subr.mxu0 0.0
        %1042 = vmatpush1.msra.mxu0 0.0
        %1043 = vmatprep.subr.mxu0 0.0
        %1044 = vmatpush1.msra.mxu0 0.0
        %1045 = vmatprep.subr.mxu0 0.0
        %1046 = vmatpush1.msra.mxu0 0.0
        %1047 = vmatprep.subr.mxu0 0.0
        %1048 = vmatpush1.msra.mxu0 0.0
        %1049 = vmatprep.subr.mxu0 0.0
        %1050 = vmatpush1.msra.mxu0 0.0
        %1051 = vmatprep.subr.mxu0 0.0
        %1052 = vmatpush1.msra.mxu0 0.0
        %1053 = vmatprep.subr.mxu0 0.0
        %1054 = vmatpush1.msra.mxu0 0.0
        %1055 = vmatprep.subr.mxu0 0.0
        %1056 = vmatpush1.msra.mxu0 0.0
        %1057 = vmatprep.subr.mxu0 0.0
        %1058 = vmatpush1.msra.mxu0 0.0
        %1059 = vmatprep.subr.mxu0 0.0
        %1060 = vmatpush1.msra.mxu0 0.0
        %1061 = vmatprep.subr.mxu0 0.0
        %1062 = vmatpush1.msra.mxu0 0.0
        %1063 = vmatprep.subr.mxu0 0.0
        %1064 = vmatpush1.msra.mxu0 0.0
        %1065 = vmatprep.subr.mxu0 0.0
        %1066 = vmatpush1.msra.mxu0 0.0
        %1067 = vmatprep.subr.mxu0 0.0
        %1068 = vmatpush1.msra.mxu0 0.0
        %1069 = vmatprep.subr.mxu0 0.0
        %1070 = vmatpush1.msra.mxu0 0.0
        %1071 = vmatprep.subr.mxu0 0.0
        %1072 = vmatpush1.msra.mxu0 0.0
        %1073 = vmatprep.subr.mxu0 0.0
        %1074 = vmatpush1.msra.mxu0 0.0
        %1075 = vmatprep.subr.mxu0 0.0
        %1076 = vmatpush1.msra.mxu0 0.0
        %1077 = vmatprep.subr.mxu0 0.0
        %1078 = vmatpush1.msra.mxu0 0.0
        %1079 = vmatprep.subr.mxu0 0.0
        %1080 = vmatpush1.msra.mxu0 0.0
        %1081 = vmatprep.subr.mxu0 0.0
        %1082 = vmatpush1.msra.mxu0 0.0
        %1083 = vmatprep.subr.mxu0 0.0
        %1084 = vmatpush1.msra.mxu0 0.0
        %1085 = vmatprep.subr.mxu0 0.0
        %1086 = vmatpush1.msra.mxu0 0.0
        %1087 = vmatprep.subr.mxu0 0.0
        %1088 = vmatpush1.msra.mxu0 0.0
        %1089 = vmatprep.subr.mxu0 0.0
        %1090 = vmatpush1.msra.mxu0 0.0
        %1091 = vmatprep.subr.mxu0 0.0
        %1092 = vmatpush1.msra.mxu0 0.0
        %1093 = vmatprep.subr.mxu0 0.0
        %1094 = vmatpush1.msra.mxu0 0.0
        %1095 = vmatprep.subr.mxu0 0.0
        %1096 = vmatpush1.msra.mxu0 0.0
        %1097 = vmatprep.subr.mxu0 0.0
        %1098 = vmatpush1.msra.mxu0 0.0
        %1099 = vmatprep.subr.mxu0 0.0
        %1100 = vmatpush1.msra.mxu0 0.0
        %1101 = vmatprep.mubr.f32.mxu0 0.0
        %1102 = vmatmul.mubr.f32.gmra.mrb[0].mxu0 %v1035
        %v1103 = vpop.f32.mrb[0].mxu0
        %v1104 = vadd.f32 0.0, %v1103
        %v1105 = vpop.f32.mrb[0].mxu0
        %1106 = vdwg.mxu0
        %1108 = vrot.lane.b32.xlu0 %v1104, 24
        %v1109 = vpop.permute.xlu0 %1108
        %vm1111 = vcmask 261312
        %1112 = vst.msk [vmem:[%s253] sm:$0xff] %vm1111, %v1109
        %s1113 = sand.u32 %s120, 1
        %s1114 = scalar_lea.sflag [#allocation4], %s1113
        %s1115 = sand.u32 %s120, 1
        %s1116 = smul.addr %s1115, 8
        %s1117 = scalar_lea.vmem [#allocation8], %s1116
        // Predicated region
        $region45: #{multi_head_attention.1} parent=31 // pred_check
          %p1118 = pneg %p130
        $region46: #{multi_head_attention.1} parent=31 // pred_check_branch
          %1120 = sbr.rel (%p1118) target = $region48
        $region47: #{multi_head_attention.1} parent=31 // pred_region
          %s1122 = ssub.s32 128, 128
          %1123 = vsyncadd %s1114, %s1122
          %s1124 = sadd.s32 %s28, %s27
          %s1125 = smul.addr %s1124, 128
          %s1126 = scalar_lea.hbm %s3, %s1125
          %s1128 = sshll.u32 %s1117, 4
          %s1129 = int_to_ptr.vmem [resolvable:$true] %s1128
          %1131 = dma.vmem_to_hbm [thread:$0]  %s1129, 128, %s1126, %s1114
        $region48: #{multi_head_attention.1} parent=31 // pred_fallthru
          _
      $region32: #{multi_head_attention.1} parent=5 // pred_fallthru
        _
      %p1132 = scmp.le.s32.totalorder 2, %s18
      // Predicated region
      $region49: #{multi_head_attention.1} parent=5 // pred_check
        %p1133 = pneg %p1132
      $region50: #{multi_head_attention.1} parent=5 // pred_check_branch
        %1135 = sbr.rel (%p1133) target = $region52
      $region51: #{multi_head_attention.1} parent=5 // pred_region
        %s1136 = ssub.s32 %s18, 2
        // Predicated region
        $region53: #{multi_head_attention.1} parent=51 // pred_check
          %p1137 = pneg %p136
        $region54: #{multi_head_attention.1} parent=51 // pred_check_branch
          %1139 = sbr.rel (%p1137) target = $region56
        $region55: #{multi_head_attention.1} parent=51 // pred_region
          %s1140 = sand.u32 %s121, 1
          %s1141 = scalar_lea.sflag [#allocation4], %s1140
          %s1142 = sand.u32 %s121, 1
          %s1143 = smul.addr %s1142, 8
          %s1144 = scalar_lea.vmem [#allocation8], %s1143
          %1145 = dma.done %s1141, 128
        $region56: #{multi_head_attention.1} parent=51 // pred_fallthru
          _
      $region52: #{multi_head_attention.1} parent=5 // pred_fallthru
        _
    $region6: #{multi_head_attention.1} parent=1 // loop_footer
      %s22 = sadd.s32 1, %s18
    $region7: #{multi_head_attention.1} parent=1 // loop_footer_branch
      %17 = sbr.rel target = $region3
    $region8: #{multi_head_attention.1} parent=1 // loop_exit
      _
    %1146 = vsyncpa [#allocation3], 1
    %s1147 = scalar_lea.sflag [#allocation3], 1
    %1148 = vsyncpa %s1147, 1
    %1149 = vsyncpa [#allocation6], 1
    %s1150 = scalar_lea.sflag [#allocation6], 1
    %1151 = vsyncpa %s1150, 1
    %1152 = vsyncpa [#allocation4], 1
    %s1153 = scalar_lea.sflag [#allocation4], 1
    %1154 = vsyncpa %s1153, 1

</llo_original>
